<compile_context>
chip_gen: v7x
topology: tpu7x:2x2x1
jax: 0.10.0
libtpu: 0.0.40
codegen_flags: <defaults>
</compile_context>

<pallas_src>
import jax
import jax.numpy as jnp
from jax import lax
from jax.experimental import pallas as pl
from jax.experimental.pallas import tpu as pltpu


def _round_up(n, m):
    return ((n + m - 1) // m) * m


def _choose_k_tiling(F, tk_target):
    """Pick a K tile (multiple of 128) and the total padded K extent."""
    f128 = _round_up(F, 128)
    grid_k = max(1, (f128 + tk_target - 1) // tk_target)
    tk = _round_up((f128 + grid_k - 1) // grid_k, 128)
    f_tot = grid_k * tk
    return tk, f_tot, grid_k


# ---------------------------------------------------------------------------
# Kernel
# ---------------------------------------------------------------------------
def _cosmo_kernel(x_ref, w0t_ref, b0_ref, w1_ref, b1_ref, w2_ref, b2_ref,
                  base_ref, cosmo_ref, acc_ref):
    k = pl.program_id(1)

    @pl.when(k == 0)
    def _init():
        # Fold b0 into the accumulator init (saves an epilogue add + broadcast).
        acc_ref[...] = jnp.broadcast_to(b0_ref[...], acc_ref.shape)

    # x slab is streamed as unpadded f32; cast to bf16 here for the MXU (the
    # VPU cast hides under the HBM-bound DMA stream).  W0 arrives transposed
    # and lane-dense as [D, TK]; contract both last (K) dims -> [TB, D].
    x_bf16 = x_ref[...].astype(jnp.bfloat16)
    acc_ref[...] += lax.dot_general(
        x_bf16, w0t_ref[...],
        dimension_numbers=(((1,), (1,)), ((), ())),
        preferred_element_type=jnp.float32)

    # Epilogue only on the final K step: projector + L2 normalize + stores.
    @pl.when(k == pl.num_programs(1) - 1)
    def _finalize():
        base = acc_ref[...]                                 # f32 [TB, D], b0 included
        base_ref[...] = base.astype(base_ref.dtype)

        # cosmology_projector: Linear -> ReLU -> Linear -> L2Norm (all f32;
        # these matmuls are tiny and run once per batch tile).
        h = jnp.dot(base, w1_ref[...],
                    preferred_element_type=jnp.float32) + b1_ref[...]
        h = jnp.maximum(h, 0.0)                             # f32 [TB, Hd]

        c = jnp.dot(h, w2_ref[...],
                    preferred_element_type=jnp.float32) + b2_ref[...]

        # F.normalize semantics: c / max(||c||, 1e-12) via full-precision rsqrt.
        sq = jnp.sum(c * c, axis=1, keepdims=True)
        inv = lax.rsqrt(jnp.maximum(sq, 1e-24))             # == 1 / max(||c||, 1e-12)
        cosmo_ref[...] = (c * inv).astype(cosmo_ref.dtype)


# ---------------------------------------------------------------------------
# VMEM budgeting
# ---------------------------------------------------------------------------
def _pick_vmem_limit(tb, tk, d, hd, p):
    """VMEM budget from actual tile sizes (with internal layout padding) + headroom."""
    lane = lambda n: _round_up(n, 128)
    sub = lambda n: _round_up(n, 8)
    x_buf = 2 * sub(tb) * tk * 4                       # f32 x slab, double-buffered
    w0t_buf = 2 * sub(d) * tk * 2                      # bf16 transposed W0 slab
    resident = (2 * (sub(d) * lane(hd) + sub(hd) * lane(p)) * 4
                + 2 * 8 * (lane(d) + lane(hd) + lane(p)) * 4)  # tiny f32 residents
    acc = sub(tb) * lane(d) * 4                        # f32 accumulator scratch
    outs = 2 * sub(tb) * (lane(d) + lane(p)) * 4       # f32 output tiles
    budget = x_buf + w0t_buf + resident + acc + outs
    limit = max(int(budget * 1.5) + (4 << 20), 32 << 20)
    try:
        cap = pltpu.get_tpu_info().vmem_capacity_bytes
        limit = min(limit, int(cap * 0.75))            # never request full VMEM
    except Exception:
        limit = min(limit, 48 << 20)                   # conservative (v7x-safe) fallback
    return limit


# ---------------------------------------------------------------------------
# One-time parameter preparation (hoisted out of the forward path)
# ---------------------------------------------------------------------------
def prepare_params(params, *, tk_target=4096):
    """Pre-transpose / pre-cast / pre-pad weights ONCE so the forward path does
    no extra HBM passes over the (potentially large) W0."""
    w0 = params["w0"]
    F, D = w0.shape
    _, f_tot, _ = _choose_k_tiling(F, tk_target)

    w0t = jnp.transpose(w0).astype(jnp.bfloat16)            # [D, F], lane-dense
    if f_tot != F:
        w0t = jnp.zeros((D, f_tot), jnp.bfloat16).at[:, :F].set(w0t)

    return {
        "w0t": w0t,
        "b0": params["b0"].astype(jnp.float32).reshape(1, D),
        "w1": params["w1"].astype(jnp.float32),
        "b1": params["b1"].astype(jnp.float32).reshape(1, -1),
        "w2": params["w2"].astype(jnp.float32),
        "b2": params["b2"].astype(jnp.float32).reshape(1, -1),
    }


# ---------------------------------------------------------------------------
# Forward wrapper
# ---------------------------------------------------------------------------
def cosmology_contrastive_forward(x, prepared, *, tb=None, tk_target=4096):
    """x: [B, C, H, W] float32 (NCHW). Returns dict with 'base' and 'cosmology'."""
    B = x.shape[0]
    F = x.shape[1] * x.shape[2] * x.shape[3]
    x_flat = x.reshape(B, F).astype(jnp.float32)             # glue reshape only

    w0t = prepared["w0t"]
    D = w0t.shape[0]
    Hd = prepared["w1"].shape[1]
    P = prepared["w2"].shape[1]

    TK, F_tot, grid_k = _choose_k_tiling(F, tk_target)
    assert w0t.shape[1] == F_tot, "prepared params don't match input feature count"

    # Batch tiling.  For B <= 256 use a single exact tile (no batch padding, no
    # extra HBM pass over x).  For larger B, 256-row tiles (sublane aligned).
    # NOTE(v7x): with >= 2 batch tiles the 'parallel' batch axis shards across
    # both TensorCores; pass tb= explicitly to force that for medium batches.
    if tb is not None:
        TB = tb
        B_pad = _round_up(B, TB)
    elif B <= 256:
        TB, B_pad = B, B
    else:
        TB = 256
        B_pad = _round_up(B, TB)

    # Only materialize a padded copy of x when strictly required.
    if B_pad != B or F_tot != F:
        x_in = jnp.zeros((B_pad, F_tot), jnp.float32).at[:B, :F].set(x_flat)
    else:
        x_in = x_flat

    grid = (B_pad // TB, grid_k)
    vmem_limit = _pick_vmem_limit(TB, TK, D, Hd, P)

    cost = pl.CostEstimate(
        flops=2 * B_pad * F_tot * D + 2 * B_pad * (D * Hd + Hd * P),
        transcendentals=B_pad,
        bytes_accessed=(B_pad * F_tot * 4                 # x (f32 stream)
                        + (B_pad // TB) * D * F_tot * 2   # W0^T re-streamed per batch tile
                        + B_pad * (D + P) * 4),           # outputs
    )

    base_out, cosmo_out = pl.pallas_call(
        _cosmo_kernel,
        out_shape=(
            jax.ShapeDtypeStruct((B_pad, D), jnp.float32),
            jax.ShapeDtypeStruct((B_pad, P), jnp.float32),
        ),
        grid_spec=pltpu.PrefetchScalarGridSpec(
            num_scalar_prefetch=0,
            grid=grid,
            in_specs=[
                pl.BlockSpec((TB, TK), lambda i, k: (i, k)),     # x slab (f32)
                pl.BlockSpec((D, TK), lambda i, k: (0, k)),      # W0^T K-slab (bf16)
                pl.BlockSpec((1, D), lambda i, k: (0, 0)),       # b0 (resident)
                pl.BlockSpec((D, Hd), lambda i, k: (0, 0)),      # W1 (resident)
                pl.BlockSpec((1, Hd), lambda i, k: (0, 0)),      # b1 (resident)
                pl.BlockSpec((Hd, P), lambda i, k: (0, 0)),      # W2 (resident)
                pl.BlockSpec((1, P), lambda i, k: (0, 0)),       # b2 (resident)
            ],
            out_specs=(
                pl.BlockSpec((TB, D), lambda i, k: (i, 0)),      # base (written at k==last)
                pl.BlockSpec((TB, P), lambda i, k: (i, 0)),      # cosmology
            ),
            scratch_shapes=[pltpu.VMEM((TB, D), jnp.float32)],   # f32 accumulator
        ),
        compiler_params=pltpu.CompilerParams(
            dimension_semantics=("parallel", "arbitrary"),
            vmem_limit_bytes=vmem_limit,
        ),
        cost_estimate=cost,
    )(x_in, w0t, prepared["b0"], prepared["w1"], prepared["b1"],
      prepared["w2"], prepared["b2"])

    if B_pad != B:
        base_out = base_out[:B]
        cosmo_out = cosmo_out[:B]
    return {"base": base_out, "cosmology": cosmo_out}


# ---------------------------------------------------------------------------
# Synthetic parameters + pure-JAX reference
# ---------------------------------------------------------------------------
def init_params(key, in_features, embedding_dim):
    """Deterministic synthetic parameters matching the module's shapes."""
    k0, k1, k2 = jax.random.split(key, 3)
    hidden = embedding_dim // 2
    proj_out = 64
    scale0 = 1.0 / jnp.sqrt(jnp.float32(in_features))
    scale1 = 1.0 / jnp.sqrt(jnp.float32(embedding_dim))
    scale2 = 1.0 / jnp.sqrt(jnp.float32(hidden))
    return {
        # synthetic base_model (linear encoder)
        "w0": jax.random.normal(k0, (in_features, embedding_dim), jnp.float32) * scale0,
        "b0": jnp.zeros((1, embedding_dim), jnp.float32),
        # cosmology_projector: Linear(D, D//2) -> ReLU -> Linear(D//2, 64) -> L2Norm
        "w1": jax.random.normal(k1, (embedding_dim, hidden), jnp.float32) * scale1,
        "b1": jnp.zeros((1, hidden), jnp.float32),
        "w2": jax.random.normal(k2, (hidden, proj_out), jnp.float32) * scale2,
        "b2": jnp.zeros((1, proj_out), jnp.float32),
    }


def _reference_forward(x, params):
    """Pure-JAX reference: bf16 operands / f32 accumulate for x@W0 (matching the
    kernel's MXU numerics), full f32 for the tiny projector."""
    B = x.shape[0]
    xf = x.reshape(B, -1)
    bf16 = jnp.bfloat16
    base = jnp.dot(xf.astype(bf16), params["w0"].astype(bf16),
                   preferred_element_type=jnp.float32) + params["b0"]
    h = jnp.maximum(jnp.dot(base, params["w1"],
                            preferred_element_type=jnp.float32) + params["b1"], 0.0)
    c = jnp.dot(h, params["w2"],
                preferred_element_type=jnp.float32) + params["b2"]
    norm = jnp.sqrt(jnp.sum(c * c, axis=1, keepdims=True))
    cosmo = c / jnp.maximum(norm, 1e-12)
    return base, cosmo


if __name__ == "__main__":
    key = jax.random.PRNGKey(0)
    kx, kp = jax.random.split(key)

    # Small shapes consistent with the forward: NCHW image input, embedding_dim=32.
    B, C, H, W = 2, 4, 16, 16
    embedding_dim = 32

    x = jax.random.normal(kx, (B, C, H, W), jnp.float32)
    params = init_params(kp, C * H * W, embedding_dim)
    prepared = prepare_params(params)          # one-time pad/cast/transpose

    out = cosmology_contrastive_forward(x, prepared)
    jax.block_until_ready(out)

    assert out["base"].shape == (B, embedding_dim)
    assert out["cosmology"].shape == (B, 64)

    # L2Norm sanity: unit-norm rows (F.normalize semantics).
    norms = jnp.linalg.norm(out["cosmology"], axis=1)
    assert jnp.allclose(norms, jnp.ones_like(norms), atol=1e-4)

    # Cross-check against a plain-JAX reference with matching numerics.
    base_ref, cosmo_ref = _reference_forward(x, params)
    assert jnp.allclose(out["base"], base_ref, atol=5e-2, rtol=5e-2)
    assert jnp.allclose(out["cosmology"], cosmo_ref, atol=5e-2, rtol=5e-2)

    print("KERNEL_OK")
</pallas_src>

<mosaic_0001>
module attributes {stable_mosaic.version = 11 : i64} {
  func.func @_cosmo_kernel(%arg0: i32, %arg1: i32, %arg2: memref<2x1024xf32, #tpu.memory_space<vmem>>, %arg3: memref<32x1024xbf16, #tpu.memory_space<vmem>>, %arg4: memref<1x32xf32, #tpu.memory_space<vmem>>, %arg5: memref<32x16xf32, #tpu.memory_space<vmem>>, %arg6: memref<1x16xf32, #tpu.memory_space<vmem>>, %arg7: memref<16x64xf32, #tpu.memory_space<vmem>>, %arg8: memref<1x64xf32, #tpu.memory_space<vmem>>, %arg9: memref<2x32xf32, #tpu.memory_space<vmem>>, %arg10: memref<2x64xf32, #tpu.memory_space<vmem>>, %arg11: memref<2x32xf32, #tpu.memory_space<vmem>>) attributes {dimension_semantics = [#tpu.dimension_semantics<parallel>, #tpu.dimension_semantics<arbitrary>], iteration_bounds = array<i64: 1, 1>, scalar_prefetch = 0 : i64, scratch_operands = 1 : i64, tpu.core_type = #tpu.core_type<tc>, window_params = [{transform_indices = @transform_0, window_bounds = array<i64: 2, 1024>}, {transform_indices = @transform_1, window_bounds = array<i64: 32, 1024>}, {pipeline_mode = #tpu.pipeline_mode<synchronous>, transform_indices = @transform_2, window_bounds = array<i64: 1, 32>}, {pipeline_mode = #tpu.pipeline_mode<synchronous>, transform_indices = @transform_3, window_bounds = array<i64: 32, 16>}, {pipeline_mode = #tpu.pipeline_mode<synchronous>, transform_indices = @transform_4, window_bounds = array<i64: 1, 16>}, {pipeline_mode = #tpu.pipeline_mode<synchronous>, transform_indices = @transform_5, window_bounds = array<i64: 16, 64>}, {pipeline_mode = #tpu.pipeline_mode<synchronous>, transform_indices = @transform_6, window_bounds = array<i64: 1, 64>}, {transform_indices = @transform_7, window_bounds = array<i64: 2, 32>}, {transform_indices = @transform_8, window_bounds = array<i64: 2, 64>}]} {
    %c0_i32 = arith.constant 0 : i32
    %0 = arith.cmpi eq, %arg1, %c0_i32 : i32
    %1 = arith.extui %0 : i1 to i32
    %c0_i32_0 = arith.constant 0 : i32
    %2 = arith.cmpi ne, %1, %c0_i32_0 : i32
    scf.if %2 {
      %c0_10 = arith.constant 0 : index
      %c0_11 = arith.constant 0 : index
      %13 = vector.load %arg4[%c0_10, %c0_11] : memref<1x32xf32, #tpu.memory_space<vmem>>, vector<1x32xf32>
      %14 = vector.shape_cast %13 : vector<1x32xf32> to vector<1x32xf32>
      %15 = vector.broadcast %14 : vector<1x32xf32> to vector<2x32xf32>
      %c0_12 = arith.constant 0 : index
      %c0_13 = arith.constant 0 : index
      %16 = vector.load %arg11[%c0_12, %c0_13] : memref<2x32xf32, #tpu.memory_space<vmem>>, vector<2x32xf32>
      tpu.vector_store %arg11[%c0_12, %c0_13], %15 {strides = array<i32>} : memref<2x32xf32, #tpu.memory_space<vmem>>, vector<2x32xf32>,
    } else {
    }
    %c0 = arith.constant 0 : index
    %c0_1 = arith.constant 0 : index
    %3 = vector.load %arg2[%c0, %c0_1] : memref<2x1024xf32, #tpu.memory_space<vmem>>, vector<2x1024xf32>
    %4 = arith.truncf %3 : vector<2x1024xf32> to vector<2x1024xbf16>
    %c0_2 = arith.constant 0 : index
    %c0_3 = arith.constant 0 : index
    %5 = vector.load %arg11[%c0_2, %c0_3] : memref<2x32xf32, #tpu.memory_space<vmem>>, vector<2x32xf32>
    %c0_4 = arith.constant 0 : index
    %c0_5 = arith.constant 0 : index
    %6 = vector.load %arg3[%c0_4, %c0_5] : memref<32x1024xbf16, #tpu.memory_space<vmem>>, vector<32x1024xbf16>
    %cst = arith.constant dense<0.000000e+00> : vector<2x32xf32>
    %7 = tpu.matmul %4, %6, %cst {dimension_numbers = #tpu.dot_dimension_numbers<[1], [1], [0], [0], [0, 0, 1, 0], [], []>} : vector<2x1024xbf16>, vector<32x1024xbf16>, vector<2x32xf32> -> vector<2x32xf32>
    %8 = arith.addf %5, %7 : vector<2x32xf32>
    %c0_6 = arith.constant 0 : index
    %c0_7 = arith.constant 0 : index
    %9 = vector.load %arg11[%c0_6, %c0_7] : memref<2x32xf32, #tpu.memory_space<vmem>>, vector<2x32xf32>
    tpu.vector_store %arg11[%c0_6, %c0_7], %8 {strides = array<i32>} : memref<2x32xf32, #tpu.memory_space<vmem>>, vector<2x32xf32>,
    %c0_i32_8 = arith.constant 0 : i32
    %10 = arith.cmpi eq, %arg1, %c0_i32_8 : i32
    %11 = arith.extui %10 : i1 to i32
    %c0_i32_9 = arith.constant 0 : i32
    %12 = arith.cmpi ne, %11, %c0_i32_9 : i32
    scf.if %12 {
      %c0_10 = arith.constant 0 : index
      %c0_11 = arith.constant 0 : index
      %13 = vector.load %arg11[%c0_10, %c0_11] : memref<2x32xf32, #tpu.memory_space<vmem>>, vector<2x32xf32>
      %c0_12 = arith.constant 0 : index
      %c0_13 = arith.constant 0 : index
      %14 = vector.load %arg9[%c0_12, %c0_13] : memref<2x32xf32, #tpu.memory_space<vmem>>, vector<2x32xf32>
      tpu.vector_store %arg9[%c0_12, %c0_13], %13 {strides = array<i32>} : memref<2x32xf32, #tpu.memory_space<vmem>>, vector<2x32xf32>,
      %c0_14 = arith.constant 0 : index
      %c0_15 = arith.constant 0 : index
      %15 = vector.load %arg5[%c0_14, %c0_15] : memref<32x16xf32, #tpu.memory_space<vmem>>, vector<32x16xf32>
      %cst_16 = arith.constant dense<0.000000e+00> : vector<2x16xf32>
      %16 = tpu.matmul %13, %15, %cst_16 {dimension_numbers = #tpu.dot_dimension_numbers<[1], [0], [0], [1], [0, 0, 1, 1], [], []>} : vector<2x32xf32>, vector<32x16xf32>, vector<2x16xf32> -> vector<2x16xf32>
      %c0_17 = arith.constant 0 : index
      %c0_18 = arith.constant 0 : index
      %17 = vector.load %arg6[%c0_17, %c0_18] : memref<1x16xf32, #tpu.memory_space<vmem>>, vector<1x16xf32>
      %18 = vector.broadcast %17 : vector<1x16xf32> to vector<2x16xf32>
      %19 = arith.addf %16, %18 : vector<2x16xf32>
      %cst_19 = arith.constant 0.000000e+00 : f32
      %20 = vector.broadcast %cst_19 : f32 to vector<2x16xf32>
      %21 = arith.maximumf %19, %20 : vector<2x16xf32>
      %c0_20 = arith.constant 0 : index
      %c0_21 = arith.constant 0 : index
      %22 = vector.load %arg7[%c0_20, %c0_21] : memref<16x64xf32, #tpu.memory_space<vmem>>, vector<16x64xf32>
      %cst_22 = arith.constant dense<0.000000e+00> : vector<2x64xf32>
      %23 = tpu.matmul %21, %22, %cst_22 {dimension_numbers = #tpu.dot_dimension_numbers<[1], [0], [0], [1], [0, 0, 1, 1], [], []>} : vector<2x16xf32>, vector<16x64xf32>, vector<2x64xf32> -> vector<2x64xf32>
      %c0_23 = arith.constant 0 : index
      %c0_24 = arith.constant 0 : index
      %24 = vector.load %arg8[%c0_23, %c0_24] : memref<1x64xf32, #tpu.memory_space<vmem>>, vector<1x64xf32>
      %25 = vector.broadcast %24 : vector<1x64xf32> to vector<2x64xf32>
      %26 = arith.addf %23, %25 : vector<2x64xf32>
      %27 = arith.mulf %26, %26 : vector<2x64xf32>
      %cst_25 = arith.constant dense<0.000000e+00> : vector<2xf32>
      %28 = vector.multi_reduction <add>, %27, %cst_25 [1] : vector<2x64xf32> to vector<2xf32>
      %29 = vector.shape_cast %28 : vector<2xf32> to vector<2x1xf32>
      %cst_26 = arith.constant 1.000000e-24 : f32
      %30 = vector.broadcast %cst_26 : f32 to vector<2x1xf32>
      %31 = arith.maximumf %29, %30 : vector<2x1xf32>
      %32 = math.rsqrt %31 : vector<2x1xf32>
      %33 = vector.broadcast %32 : vector<2x1xf32> to vector<2x64xf32>
      %34 = arith.mulf %26, %33 : vector<2x64xf32>
      %c0_27 = arith.constant 0 : index
      %c0_28 = arith.constant 0 : index
      %35 = vector.load %arg10[%c0_27, %c0_28] : memref<2x64xf32, #tpu.memory_space<vmem>>, vector<2x64xf32>
      tpu.vector_store %arg10[%c0_27, %c0_28], %34 {strides = array<i32>} : memref<2x64xf32, #tpu.memory_space<vmem>>, vector<2x64xf32>,
    } else {
    }
    return
  }
  func.func @transform_0(%arg0: i32, %arg1: i32) -> (i32, i32) {
    %c0_i32 = arith.constant 0 : i32
    return %arg0, %arg1 : i32, i32
  }
  func.func @transform_1(%arg0: i32, %arg1: i32) -> (i32, i32) {
    %c0_i32 = arith.constant 0 : i32
    %c0_i32_0 = arith.constant 0 : i32
    return %c0_i32, %arg1 : i32, i32
  }
  func.func @transform_2(%arg0: i32, %arg1: i32) -> (i32, i32) {
    %c0_i32 = arith.constant 0 : i32
    %c0_i32_0 = arith.constant 0 : i32
    %c0_i32_1 = arith.constant 0 : i32
    return %c0_i32, %c0_i32_0 : i32, i32
  }
  func.func @transform_3(%arg0: i32, %arg1: i32) -> (i32, i32) {
    %c0_i32 = arith.constant 0 : i32
    %c0_i32_0 = arith.constant 0 : i32
    %c0_i32_1 = arith.constant 0 : i32
    return %c0_i32, %c0_i32_0 : i32, i32
  }
  func.func @transform_4(%arg0: i32, %arg1: i32) -> (i32, i32) {
    %c0_i32 = arith.constant 0 : i32
    %c0_i32_0 = arith.constant 0 : i32
    %c0_i32_1 = arith.constant 0 : i32
    return %c0_i32, %c0_i32_0 : i32, i32
  }
  func.func @transform_5(%arg0: i32, %arg1: i32) -> (i32, i32) {
    %c0_i32 = arith.constant 0 : i32
    %c0_i32_0 = arith.constant 0 : i32
    %c0_i32_1 = arith.constant 0 : i32
    return %c0_i32, %c0_i32_0 : i32, i32
  }
  func.func @transform_6(%arg0: i32, %arg1: i32) -> (i32, i32) {
    %c0_i32 = arith.constant 0 : i32
    %c0_i32_0 = arith.constant 0 : i32
    %c0_i32_1 = arith.constant 0 : i32
    return %c0_i32, %c0_i32_0 : i32, i32
  }
  func.func @transform_7(%arg0: i32, %arg1: i32) -> (i32, i32) {
    %c0_i32 = arith.constant 0 : i32
    %c0_i32_0 = arith.constant 0 : i32
    return %arg0, %c0_i32 : i32, i32
  }
  func.func @transform_8(%arg0: i32, %arg1: i32) -> (i32, i32) {
    %c0_i32 = arith.constant 0 : i32
    %c0_i32_0 = arith.constant 0 : i32
    return %arg0, %c0_i32 : i32, i32
  }
}

</mosaic_0001>

<llo_original>
// kernel: tpu_custom_call.1
$region0: #{tpu_custom_call.1}
  #allocation0 [shape = 'u32[]', space=smem, size = 0x4, offset = 0x4, fixed_abs, tag = 'smem constant byte address 0x4 - core index']
  #allocation1 [shape = 'u32[144,128]{1,0:T(1,128)}', space=vmem, size = 0x12000, scoped, tag = 'internal scratch']
  #allocation2 [shape = 'f32[2,32]{1,0:T(2,128)}', space=vmem, size = 0x400, scoped, tag = 'scratch operand']
  %s0 = inlined_call_operand.vmem [shape: f32[2,1024], index: 0, kind: input, shape index: {}]
  %s1 = inlined_call_operand.hbm [shape: bf16[32,1024], index: 1, kind: input, shape index: {}]
  %s2 = inlined_call_operand.vmem [shape: f32[1,32], index: 2, kind: input, shape index: {}]
  %s3 = inlined_call_operand.vmem [shape: f32[32,16], index: 3, kind: input, shape index: {}]
  %s4 = inlined_call_operand.vmem [shape: f32[1,16], index: 4, kind: input, shape index: {}]
  %s5 = inlined_call_operand.vmem [shape: f32[16,64], index: 5, kind: input, shape index: {}]
  %s6 = inlined_call_operand.vmem [shape: f32[1,64], index: 6, kind: input, shape index: {}]
  %s7 = inlined_call_operand.hbm [shape: f32[2,32], index: 7, kind: output, shape index: {0}]
  %s8 = inlined_call_operand.hbm [shape: f32[2,64], index: 8, kind: output, shape index: {1}]
  %9 = xla_tuple %s7, %s8
  %s10 = sld [smem:[#allocation0]]
  $region58: #{tpu_custom_call.1} parent=0
    _
  %s12 = ssub.s32 1, %s10
  %s13 = scalar_select 0, %s12, %s10
  $region1: #{tpu_custom_call.1} parent=0
    #allocation3 [shape = 'u8[65536]{0}', space=vmem, size = 0x10000, scoped, tag = 'input window, operand 1, single buffered']
    #allocation4 [shape = 's32[1]{0}', space=sflag, size = 0x4, scoped, tag = 'scoped memory for tpu_custom_call.1']
    #allocation5 [shape = 's32[1]{0}', space=sflag, size = 0x4, scoped, tag = 'scoped memory for tpu_custom_call.1']
    #allocation6 [shape = 'u8[1024]{0}', space=vmem, size = 0x400, scoped, tag = 'output window, operand 0, single buffered']
    #allocation7 [shape = 'u8[1024]{0}', space=vmem, size = 0x400, scoped, tag = 'output window, operand 1, single buffered']
    #allocation8 [shape = 's32[1]{0}', space=sflag, size = 0x4, scoped, tag = 'scoped memory for tpu_custom_call.1']
    %14 = vsyncpa [#allocation4], 0
    %15 = vsyncpa [#allocation5], 0
    %16 = vsyncpa [#allocation8], 0
    // Predicated region
    $region2: #{tpu_custom_call.1} parent=1 // pred_check
      _
    $region3: #{tpu_custom_call.1} parent=1 // pred_check_branch
      %18 = sbr.rel (0) target = $region5
    $region4: #{tpu_custom_call.1} parent=1 // pred_region
      _
    $region5: #{tpu_custom_call.1} parent=1 // pred_fallthru
      _
    // Predicated region
    $region6: #{tpu_custom_call.1} parent=1 // pred_check
      _
    $region7: #{tpu_custom_call.1} parent=1 // pred_check_branch
      %20 = sbr.rel (0) target = $region9
    $region8: #{tpu_custom_call.1} parent=1 // pred_region
      %s22 = ssub.s32 2048, 2048
      %23 = vsyncadd [#allocation4], %s22
      %s24 = sshll.u32 [#allocation3], 4
      %s25 = int_to_ptr.vmem [resolvable:$true] %s24
      %30 = dma.hbm_to_vmem [thread:$0]  %s1, 2048, %s25, [#allocation4], 512, 512, 32
    $region9: #{tpu_custom_call.1} parent=1 // pred_fallthru
      _
    // Predicated region
    $region10: #{tpu_custom_call.1} parent=1 // pred_check
      _
    $region11: #{tpu_custom_call.1} parent=1 // pred_check_branch
      %32 = sbr.rel (0) target = $region13
    $region12: #{tpu_custom_call.1} parent=1 // pred_region
      _
    $region13: #{tpu_custom_call.1} parent=1 // pred_fallthru
      _
    // Predicated region
    $region14: #{tpu_custom_call.1} parent=1 // pred_check
      _
    $region15: #{tpu_custom_call.1} parent=1 // pred_check_branch
      %34 = sbr.rel (0) target = $region17
    $region16: #{tpu_custom_call.1} parent=1 // pred_region
      _
    $region17: #{tpu_custom_call.1} parent=1 // pred_fallthru
      _
    // Predicated region
    $region18: #{tpu_custom_call.1} parent=1 // pred_check
      _
    $region19: #{tpu_custom_call.1} parent=1 // pred_check_branch
      %36 = sbr.rel (0) target = $region21
    $region20: #{tpu_custom_call.1} parent=1 // pred_region
      _
    $region21: #{tpu_custom_call.1} parent=1 // pred_fallthru
      _
    // Predicated region
    $region22: #{tpu_custom_call.1} parent=1 // pred_check
      _
    $region23: #{tpu_custom_call.1} parent=1 // pred_check_branch
      %38 = sbr.rel (0) target = $region25
    $region24: #{tpu_custom_call.1} parent=1 // pred_region
      _
    $region25: #{tpu_custom_call.1} parent=1 // pred_fallthru
      _
    // Predicated region
    $region26: #{tpu_custom_call.1} parent=1 // pred_check
      _
    $region27: #{tpu_custom_call.1} parent=1 // pred_check_branch
      %40 = sbr.rel (0) target = $region29
    $region28: #{tpu_custom_call.1} parent=1 // pred_region
      _
    $region29: #{tpu_custom_call.1} parent=1 // pred_fallthru
      _
    // Predicated region
    $region30: #{tpu_custom_call.1} parent=1 // pred_check
      _
    $region31: #{tpu_custom_call.1} parent=1 // pred_check_branch
      %42 = sbr.rel (0) target = $region33
    $region32: #{tpu_custom_call.1} parent=1 // pred_region
      %43 = dma.done [#allocation4], 2048
    $region33: #{tpu_custom_call.1} parent=1 // pred_fallthru
      _
    %p45 = scmp.eq.s32.totalorder 0, 0
    // Predicated region
    $region34: #{tpu_custom_call.1} parent=1 // pred_check
      %p46 = pneg %p45
    $region35: #{tpu_custom_call.1} parent=1 // pred_check_branch
      %48 = sbr.rel (%p46) target = $region37
    $region36: #{tpu_custom_call.1} parent=1 // pred_region
      %v49 = vld [vmem:[%s2] sm:$0x1]
      %v51 = vlaneseq
      %v52 = vshrl.u32 %v51, 7
      %v53 = vsub.s32 0, %v52
      %v54 = vrot.slane %v49, %v53
      %vm56 = vcmask 254976
      %57 = vst.msk [vmem:[#allocation2] sm:$0x3] %vm56, %v54
    $region37: #{tpu_custom_call.1} parent=1 // pred_fallthru
      _
    %v58 = vld [vmem:[%s0] sm:$0xff]
    %v59 = vld [vmem:[%s0 + $0x8] sm:$0xff]
    %v62 = vcombine.high %v58, %v58
    %v64 = vunpack.c.l.s4 1983009808
    %v65 = vunpack.c.0.s8 %v64
    %v66 = vlaneseq
    %v67 = vshrl.u32 %v66, 7
    %v68 = vsub.s32 %v65, %v67
    %v69 = vrot.slane %v58, %v68
    %v71 = vunpack.c.l.s4 1983009808
    %v72 = vunpack.c.0.s8 %v71
    %v73 = vlaneseq
    %v74 = vshrl.u32 %v73, 7
    %v75 = vsub.s32 %v72, %v74
    %v76 = vrot.slane %v62, %v75
    %v77 = vcombine.high %v69, %v69
    %v78 = vcombine.high %v76, %v76
    %v79 = vcombine.high %v59, %v59
    %v81 = vunpack.c.l.s4 1983009808
    %v82 = vunpack.c.0.s8 %v81
    %v83 = vlaneseq
    %v84 = vshrl.u32 %v83, 7
    %v85 = vsub.s32 %v82, %v84
    %v86 = vrot.slane %v59, %v85
    %v88 = vunpack.c.l.s4 1983009808
    %v89 = vunpack.c.0.s8 %v88
    %v90 = vlaneseq
    %v91 = vshrl.u32 %v90, 7
    %v92 = vsub.s32 %v89, %v91
    %v93 = vrot.slane %v79, %v92
    %v94 = vcombine.high %v86, %v86
    %v95 = vcombine.high %v93, %v93
    %v104 = vpack.c.bf16 %v69, %v69
    %v105 = vpack.c.bf16 %v77, %v77
    %v106 = vpack.c.bf16 %v76, %v76
    %v107 = vpack.c.bf16 %v78, %v78
    %v108 = vpack.c.bf16 %v86, %v86
    %v109 = vpack.c.bf16 %v94, %v94
    %v110 = vpack.c.bf16 %v93, %v93
    %v111 = vpack.c.bf16 %v95, %v95
    %v112 = vld [vmem:[#allocation2] sm:$0x3]
    %v113 = vld [vmem:[#allocation3] sm:$0xff]
    %v114 = vld [vmem:[#allocation3 + $0x8] sm:$0xff]
    %v115 = vld [vmem:[#allocation3 + $0x10] sm:$0xff]
    %v116 = vld [vmem:[#allocation3 + $0x18] sm:$0xff]
    %v117 = vld [vmem:[#allocation3 + $0x20] sm:$0xff]
    %v118 = vld [vmem:[#allocation3 + $0x28] sm:$0xff]
    %v119 = vld [vmem:[#allocation3 + $0x30] sm:$0xff]
    %v120 = vld [vmem:[#allocation3 + $0x38] sm:$0xff]
    %v121 = vld [vmem:[#allocation3 + $0x40] sm:$0xff]
    %v122 = vld [vmem:[#allocation3 + $0x48] sm:$0xff]
    %v123 = vld [vmem:[#allocation3 + $0x50] sm:$0xff]
    %v124 = vld [vmem:[#allocation3 + $0x58] sm:$0xff]
    %v125 = vld [vmem:[#allocation3 + $0x60] sm:$0xff]
    %v126 = vld [vmem:[#allocation3 + $0x68] sm:$0xff]
    %v127 = vld [vmem:[#allocation3 + $0x70] sm:$0xff]
    %v128 = vld [vmem:[#allocation3 + $0x78] sm:$0xff]
    %v145 = vunpack.c.l.b16 %v113
    %v146 = vunpack.c.h.b16 %v113
    %v147 = vunpack.c.l.b16 %v114
    %v148 = vunpack.c.h.b16 %v114
    %v149 = vunpack.c.l.b16 %v115
    %v150 = vunpack.c.h.b16 %v115
    %v151 = vunpack.c.l.b16 %v116
    %v152 = vunpack.c.h.b16 %v116
    %v153 = vunpack.c.l.b16 %v117
    %v154 = vunpack.c.h.b16 %v117
    %v155 = vunpack.c.l.b16 %v118
    %v156 = vunpack.c.h.b16 %v118
    %v157 = vunpack.c.l.b16 %v119
    %v158 = vunpack.c.h.b16 %v119
    %v159 = vunpack.c.l.b16 %v120
    %v160 = vunpack.c.h.b16 %v120
    %v161 = vunpack.c.l.b16 %v121
    %v162 = vunpack.c.h.b16 %v121
    %v163 = vunpack.c.l.b16 %v122
    %v164 = vunpack.c.h.b16 %v122
    %v165 = vunpack.c.l.b16 %v123
    %v166 = vunpack.c.h.b16 %v123
    %v167 = vunpack.c.l.b16 %v124
    %v168 = vunpack.c.h.b16 %v124
    %v169 = vunpack.c.l.b16 %v125
    %v170 = vunpack.c.h.b16 %v125
    %v171 = vunpack.c.l.b16 %v126
    %v172 = vunpack.c.h.b16 %v126
    %v173 = vunpack.c.l.b16 %v127
    %v174 = vunpack.c.h.b16 %v127
    %v175 = vunpack.c.l.b16 %v128
    %v176 = vunpack.c.h.b16 %v128
    %v177 = vpack.c.b16 %v153, %v145
    %v178 = vpack.c.b16 %v154, %v146
    %v179 = vpack.c.b16 %v155, %v147
    %v180 = vpack.c.b16 %v156, %v148
    %v181 = vpack.c.b16 %v157, %v149
    %v182 = vpack.c.b16 %v158, %v150
    %v183 = vpack.c.b16 %v159, %v151
    %v184 = vpack.c.b16 %v160, %v152
    %v185 = vpack.c.b16 %v169, %v161
    %v186 = vpack.c.b16 %v170, %v162
    %v187 = vpack.c.b16 %v171, %v163
    %v188 = vpack.c.b16 %v172, %v164
    %v189 = vpack.c.b16 %v173, %v165
    %v190 = vpack.c.b16 %v174, %v166
    %v191 = vpack.c.b16 %v175, %v167
    %v192 = vpack.c.b16 %v176, %v168
    %209 = vmatprep.subr.bf16.mxu0 %v178
    %210 = vmatpush1.bf16.xpose.msra.mxu0 %v177
    %211 = vmatprep.subr.bf16.mxu0 %v186
    %212 = vmatpush1.bf16.xpose.msra.mxu0 %v185
    %213 = vmatprep.subr.bf16.mxu0 0
    %214 = vmatpush1.bf16.xpose.msra.mxu0 0
    %215 = vmatprep.subr.bf16.mxu0 0
    %216 = vmatpush1.bf16.xpose.msra.mxu0 0
    %217 = vmatprep.subr.bf16.mxu0 0
    %218 = vmatpush1.bf16.xpose.msra.mxu0 0
    %219 = vmatprep.subr.bf16.mxu0 0
    %220 = vmatpush1.bf16.xpose.msra.mxu0 0
    %221 = vmatprep.subr.bf16.mxu0 0
    %222 = vmatpush1.bf16.xpose.msra.mxu0 0
    %223 = vmatprep.subr.bf16.mxu0 0
    %224 = vmatpush1.bf16.xpose.msra.mxu0 0
    %225 = vmatprep.subr.bf16.mxu0 0
    %226 = vmatpush1.bf16.xpose.msra.mxu0 0
    %227 = vmatprep.subr.bf16.mxu0 0
    %228 = vmatpush1.bf16.xpose.msra.mxu0 0
    %229 = vmatprep.subr.bf16.mxu0 0
    %230 = vmatpush1.bf16.xpose.msra.mxu0 0
    %231 = vmatprep.subr.bf16.mxu0 0
    %232 = vmatpush1.bf16.xpose.msra.mxu0 0
    %233 = vmatprep.subr.bf16.mxu0 0
    %234 = vmatpush1.bf16.xpose.msra.mxu0 0
    %235 = vmatprep.subr.bf16.mxu0 0
    %236 = vmatpush1.bf16.xpose.msra.mxu0 0
    %237 = vmatprep.subr.bf16.mxu0 0
    %238 = vmatpush1.bf16.xpose.msra.mxu0 0
    %239 = vmatprep.subr.bf16.mxu0 0
    %240 = vmatpush1.bf16.xpose.msra.mxu0 0
    %241 = vmatprep.mubr.bf16.mxu0 %v105
    %242 = vmatmul.mubr.bf16.gmra.mrb[0].mxu0 %v104
    %v243 = vpop.f32.mrb[0].mxu0
    %v244 = vadd.f32 0.0, %v243
    %v245 = vpop.f32.mrb[0].mxu0
    %v246 = vpop.f32.mrb[0].mxu0
    %v247 = vpop.f32.mrb[0].mxu0
    %248 = vdwg.mxu0
    %249 = vmatprep.subr.bf16.mxu0 %v180
    %250 = vmatpush1.bf16.xpose.msra.mxu0 %v179
    %251 = vmatprep.subr.bf16.mxu0 %v188
    %252 = vmatpush1.bf16.xpose.msra.mxu0 %v187
    %253 = vmatprep.subr.bf16.mxu0 0
    %254 = vmatpush1.bf16.xpose.msra.mxu0 0
    %255 = vmatprep.subr.bf16.mxu0 0
    %256 = vmatpush1.bf16.xpose.msra.mxu0 0
    %257 = vmatprep.subr.bf16.mxu0 0
    %258 = vmatpush1.bf16.xpose.msra.mxu0 0
    %259 = vmatprep.subr.bf16.mxu0 0
    %260 = vmatpush1.bf16.xpose.msra.mxu0 0
    %261 = vmatprep.subr.bf16.mxu0 0
    %262 = vmatpush1.bf16.xpose.msra.mxu0 0
    %263 = vmatprep.subr.bf16.mxu0 0
    %264 = vmatpush1.bf16.xpose.msra.mxu0 0
    %265 = vmatprep.subr.bf16.mxu0 0
    %266 = vmatpush1.bf16.xpose.msra.mxu0 0
    %267 = vmatprep.subr.bf16.mxu0 0
    %268 = vmatpush1.bf16.xpose.msra.mxu0 0
    %269 = vmatprep.subr.bf16.mxu0 0
    %270 = vmatpush1.bf16.xpose.msra.mxu0 0
    %271 = vmatprep.subr.bf16.mxu0 0
    %272 = vmatpush1.bf16.xpose.msra.mxu0 0
    %273 = vmatprep.subr.bf16.mxu0 0
    %274 = vmatpush1.bf16.xpose.msra.mxu0 0
    %275 = vmatprep.subr.bf16.mxu0 0
    %276 = vmatpush1.bf16.xpose.msra.mxu0 0
    %277 = vmatprep.subr.bf16.mxu0 0
    %278 = vmatpush1.bf16.xpose.msra.mxu0 0
    %279 = vmatprep.subr.bf16.mxu0 0
    %280 = vmatpush1.bf16.xpose.msra.mxu0 0
    %281 = vmatprep.mubr.bf16.mxu0 %v107
    %282 = vmatmul.mubr.bf16.gmra.mrb[0].mxu0 %v106
    %v283 = vpop.f32.mrb[0].mxu0
    %v284 = vadd.f32 %v244, %v283
    %v285 = vpop.f32.mrb[0].mxu0
    %v286 = vpop.f32.mrb[0].mxu0
    %v287 = vpop.f32.mrb[0].mxu0
    %288 = vdwg.mxu0
    %289 = vmatprep.subr.bf16.mxu0 %v182
    %290 = vmatpush1.bf16.xpose.msra.mxu0 %v181
    %291 = vmatprep.subr.bf16.mxu0 %v190
    %292 = vmatpush1.bf16.xpose.msra.mxu0 %v189
    %293 = vmatprep.subr.bf16.mxu0 0
    %294 = vmatpush1.bf16.xpose.msra.mxu0 0
    %295 = vmatprep.subr.bf16.mxu0 0
    %296 = vmatpush1.bf16.xpose.msra.mxu0 0
    %297 = vmatprep.subr.bf16.mxu0 0
    %298 = vmatpush1.bf16.xpose.msra.mxu0 0
    %299 = vmatprep.subr.bf16.mxu0 0
    %300 = vmatpush1.bf16.xpose.msra.mxu0 0
    %301 = vmatprep.subr.bf16.mxu0 0
    %302 = vmatpush1.bf16.xpose.msra.mxu0 0
    %303 = vmatprep.subr.bf16.mxu0 0
    %304 = vmatpush1.bf16.xpose.msra.mxu0 0
    %305 = vmatprep.subr.bf16.mxu0 0
    %306 = vmatpush1.bf16.xpose.msra.mxu0 0
    %307 = vmatprep.subr.bf16.mxu0 0
    %308 = vmatpush1.bf16.xpose.msra.mxu0 0
    %309 = vmatprep.subr.bf16.mxu0 0
    %310 = vmatpush1.bf16.xpose.msra.mxu0 0
    %311 = vmatprep.subr.bf16.mxu0 0
    %312 = vmatpush1.bf16.xpose.msra.mxu0 0
    %313 = vmatprep.subr.bf16.mxu0 0
    %314 = vmatpush1.bf16.xpose.msra.mxu0 0
    %315 = vmatprep.subr.bf16.mxu0 0
    %316 = vmatpush1.bf16.xpose.msra.mxu0 0
    %317 = vmatprep.subr.bf16.mxu0 0
    %318 = vmatpush1.bf16.xpose.msra.mxu0 0
    %319 = vmatprep.subr.bf16.mxu0 0
    %320 = vmatpush1.bf16.xpose.msra.mxu0 0
    %321 = vmatprep.mubr.bf16.mxu0 %v109
    %322 = vmatmul.mubr.bf16.gmra.mrb[0].mxu0 %v108
    %v323 = vpop.f32.mrb[0].mxu0
    %v324 = vadd.f32 %v284, %v323
    %v325 = vpop.f32.mrb[0].mxu0
    %v326 = vpop.f32.mrb[0].mxu0
    %v327 = vpop.f32.mrb[0].mxu0
    %328 = vdwg.mxu0
    %329 = vmatprep.subr.bf16.mxu0 %v184
    %330 = vmatpush1.bf16.xpose.msra.mxu0 %v183
    %331 = vmatprep.subr.bf16.mxu0 %v192
    %332 = vmatpush1.bf16.xpose.msra.mxu0 %v191
    %333 = vmatprep.subr.bf16.mxu0 0
    %334 = vmatpush1.bf16.xpose.msra.mxu0 0
    %335 = vmatprep.subr.bf16.mxu0 0
    %336 = vmatpush1.bf16.xpose.msra.mxu0 0
    %337 = vmatprep.subr.bf16.mxu0 0
    %338 = vmatpush1.bf16.xpose.msra.mxu0 0
    %339 = vmatprep.subr.bf16.mxu0 0
    %340 = vmatpush1.bf16.xpose.msra.mxu0 0
    %341 = vmatprep.subr.bf16.mxu0 0
    %342 = vmatpush1.bf16.xpose.msra.mxu0 0
    %343 = vmatprep.subr.bf16.mxu0 0
    %344 = vmatpush1.bf16.xpose.msra.mxu0 0
    %345 = vmatprep.subr.bf16.mxu0 0
    %346 = vmatpush1.bf16.xpose.msra.mxu0 0
    %347 = vmatprep.subr.bf16.mxu0 0
    %348 = vmatpush1.bf16.xpose.msra.mxu0 0
    %349 = vmatprep.subr.bf16.mxu0 0
    %350 = vmatpush1.bf16.xpose.msra.mxu0 0
    %351 = vmatprep.subr.bf16.mxu0 0
    %352 = vmatpush1.bf16.xpose.msra.mxu0 0
    %353 = vmatprep.subr.bf16.mxu0 0
    %354 = vmatpush1.bf16.xpose.msra.mxu0 0
    %355 = vmatprep.subr.bf16.mxu0 0
    %356 = vmatpush1.bf16.xpose.msra.mxu0 0
    %357 = vmatprep.subr.bf16.mxu0 0
    %358 = vmatpush1.bf16.xpose.msra.mxu0 0
    %359 = vmatprep.subr.bf16.mxu0 0
    %360 = vmatpush1.bf16.xpose.msra.mxu0 0
    %361 = vmatprep.mubr.bf16.mxu0 %v111
    %362 = vmatmul.mubr.bf16.gmra.mrb[0].mxu0 %v110
    %v363 = vpop.f32.mrb[0].mxu0
    %v364 = vadd.f32 %v324, %v363
    %v365 = vpop.f32.mrb[0].mxu0
    %v366 = vpop.f32.mrb[0].mxu0
    %v367 = vpop.f32.mrb[0].mxu0
    %368 = vdwg.mxu0
    %v369 = vadd.f32 %v112, %v364
    %vm370 = vcmask 254976
    %371 = vst.msk [vmem:[#allocation2] sm:$0x3] %vm370, %v369
    // Predicated region
    $region38: #{tpu_custom_call.1} parent=1 // pred_check
      %p372 = pneg %p45
    $region39: #{tpu_custom_call.1} parent=1 // pred_check_branch
      %374 = sbr.rel (%p372) target = $region41
    $region40: #{tpu_custom_call.1} parent=1 // pred_region
      %v375 = vld [vmem:[#allocation2] sm:$0x3]
      %376 = vst.msk [vmem:[#allocation6] sm:$0x3] %vm370, %v375
      %v377 = vld [vmem:[%s3] sm:$0xff]
      %v378 = vld [vmem:[%s3 + $0x8] sm:$0xff]
      %v379 = vld [vmem:[%s3 + $0x10] sm:$0xff]
      %v380 = vld [vmem:[%s3 + $0x18] sm:$0xff]
      %v381 = vld [vmem:[%s4] sm:$0x1]
      %v383 = vlaneseq
      %v384 = vshrl.u32 %v383, 7
      %v385 = vsub.s32 0, %v384
      %v386 = vrot.slane %v381, %v385
      %vm388 = vcmask 261120
      %v390 = vsel %vm388, %v375, 0
      %392 = vmatprep.subr.mxu0 0.0
      %393 = vmatpush1.msra.mxu0 %v377
      %394 = vmatprep.subr.mxu0 0.0
      %395 = vmatpush1.msra.mxu0 %v378
      %396 = vmatprep.subr.mxu0 0.0
      %397 = vmatpush1.msra.mxu0 %v379
      %398 = vmatprep.subr.mxu0 0.0
      %399 = vmatpush1.msra.mxu0 %v380
      %400 = vmatprep.subr.mxu0 0.0
      %401 = vmatpush1.msra.mxu0 0.0
      %402 = vmatprep.subr.mxu0 0.0
      %403 = vmatpush1.msra.mxu0 0.0
      %404 = vmatprep.subr.mxu0 0.0
      %405 = vmatpush1.msra.mxu0 0.0
      %406 = vmatprep.subr.mxu0 0.0
      %407 = vmatpush1.msra.mxu0 0.0
      %408 = vmatprep.subr.mxu0 0.0
      %409 = vmatpush1.msra.mxu0 0.0
      %410 = vmatprep.subr.mxu0 0.0
      %411 = vmatpush1.msra.mxu0 0.0
      %412 = vmatprep.subr.mxu0 0.0
      %413 = vmatpush1.msra.mxu0 0.0
      %414 = vmatprep.subr.mxu0 0.0
      %415 = vmatpush1.msra.mxu0 0.0
      %416 = vmatprep.subr.mxu0 0.0
      %417 = vmatpush1.msra.mxu0 0.0
      %418 = vmatprep.subr.mxu0 0.0
      %419 = vmatpush1.msra.mxu0 0.0
      %420 = vmatprep.subr.mxu0 0.0
      %421 = vmatpush1.msra.mxu0 0.0
      %422 = vmatprep.subr.mxu0 0.0
      %423 = vmatpush1.msra.mxu0 0.0
      %424 = vmatprep.subr.mxu0 0.0
      %425 = vmatpush1.msra.mxu0 0.0
      %426 = vmatprep.subr.mxu0 0.0
      %427 = vmatpush1.msra.mxu0 0.0
      %428 = vmatprep.subr.mxu0 0.0
      %429 = vmatpush1.msra.mxu0 0.0
      %430 = vmatprep.subr.mxu0 0.0
      %431 = vmatpush1.msra.mxu0 0.0
      %432 = vmatprep.subr.mxu0 0.0
      %433 = vmatpush1.msra.mxu0 0.0
      %434 = vmatprep.subr.mxu0 0.0
      %435 = vmatpush1.msra.mxu0 0.0
      %436 = vmatprep.subr.mxu0 0.0
      %437 = vmatpush1.msra.mxu0 0.0
      %438 = vmatprep.subr.mxu0 0.0
      %439 = vmatpush1.msra.mxu0 0.0
      %440 = vmatprep.subr.mxu0 0.0
      %441 = vmatpush1.msra.mxu0 0.0
      %442 = vmatprep.subr.mxu0 0.0
      %443 = vmatpush1.msra.mxu0 0.0
      %444 = vmatprep.subr.mxu0 0.0
      %445 = vmatpush1.msra.mxu0 0.0
      %446 = vmatprep.subr.mxu0 0.0
      %447 = vmatpush1.msra.mxu0 0.0
      %448 = vmatprep.subr.mxu0 0.0
      %449 = vmatpush1.msra.mxu0 0.0
      %450 = vmatprep.subr.mxu0 0.0
      %451 = vmatpush1.msra.mxu0 0.0
      %452 = vmatprep.subr.mxu0 0.0
      %453 = vmatpush1.msra.mxu0 0.0
      %454 = vmatprep.subr.mxu0 0.0
      %455 = vmatpush1.msra.mxu0 0.0
      %456 = vmatprep.mubr.f32.mxu0 0.0
      %457 = vmatmul.mubr.f32.gmra.mrb[0].mxu0 %v390
      %v458 = vpop.f32.mrb[0].mxu0
      %v459 = vadd.f32 %v386, %v458
      %v460 = vpop.f32.mrb[0].mxu0
      %461 = vdwg.mxu0
      %v462 = vmax.f32 %v459, 0.0
      %v463 = vld [vmem:[%s5] sm:$0xff]
      %v464 = vld [vmem:[%s5 + $0x8] sm:$0xff]
      %v465 = vld [vmem:[%s6] sm:$0x1]
      %v467 = vlaneseq
      %v468 = vshrl.u32 %v467, 7
      %v469 = vsub.s32 0, %v468
      %v470 = vrot.slane %v465, %v469
      %vm472 = vcmask 130048
      %v474 = vsel %vm472, %v462, 0
      %476 = vmatprep.subr.mxu0 0.0
      %477 = vmatpush1.msra.mxu0 %v463
      %478 = vmatprep.subr.mxu0 0.0
      %479 = vmatpush1.msra.mxu0 %v464
      %480 = vmatprep.subr.mxu0 0.0
      %481 = vmatpush1.msra.mxu0 0.0
      %482 = vmatprep.subr.mxu0 0.0
      %483 = vmatpush1.msra.mxu0 0.0
      %484 = vmatprep.subr.mxu0 0.0
      %485 = vmatpush1.msra.mxu0 0.0
      %486 = vmatprep.subr.mxu0 0.0
      %487 = vmatpush1.msra.mxu0 0.0
      %488 = vmatprep.subr.mxu0 0.0
      %489 = vmatpush1.msra.mxu0 0.0
      %490 = vmatprep.subr.mxu0 0.0
      %491 = vmatpush1.msra.mxu0 0.0
      %492 = vmatprep.subr.mxu0 0.0
      %493 = vmatpush1.msra.mxu0 0.0
      %494 = vmatprep.subr.mxu0 0.0
      %495 = vmatpush1.msra.mxu0 0.0
      %496 = vmatprep.subr.mxu0 0.0
      %497 = vmatpush1.msra.mxu0 0.0
      %498 = vmatprep.subr.mxu0 0.0
      %499 = vmatpush1.msra.mxu0 0.0
      %500 = vmatprep.subr.mxu0 0.0
      %501 = vmatpush1.msra.mxu0 0.0
      %502 = vmatprep.subr.mxu0 0.0
      %503 = vmatpush1.msra.mxu0 0.0
      %504 = vmatprep.subr.mxu0 0.0
      %505 = vmatpush1.msra.mxu0 0.0
      %506 = vmatprep.subr.mxu0 0.0
      %507 = vmatpush1.msra.mxu0 0.0
      %508 = vmatprep.subr.mxu0 0.0
      %509 = vmatpush1.msra.mxu0 0.0
      %510 = vmatprep.subr.mxu0 0.0
      %511 = vmatpush1.msra.mxu0 0.0
      %512 = vmatprep.subr.mxu0 0.0
      %513 = vmatpush1.msra.mxu0 0.0
      %514 = vmatprep.subr.mxu0 0.0
      %515 = vmatpush1.msra.mxu0 0.0
      %516 = vmatprep.subr.mxu0 0.0
      %517 = vmatpush1.msra.mxu0 0.0
      %518 = vmatprep.subr.mxu0 0.0
      %519 = vmatpush1.msra.mxu0 0.0
      %520 = vmatprep.subr.mxu0 0.0
      %521 = vmatpush1.msra.mxu0 0.0
      %522 = vmatprep.subr.mxu0 0.0
      %523 = vmatpush1.msra.mxu0 0.0
      %524 = vmatprep.subr.mxu0 0.0
      %525 = vmatpush1.msra.mxu0 0.0
      %526 = vmatprep.subr.mxu0 0.0
      %527 = vmatpush1.msra.mxu0 0.0
      %528 = vmatprep.subr.mxu0 0.0
      %529 = vmatpush1.msra.mxu0 0.0
      %530 = vmatprep.subr.mxu0 0.0
      %531 = vmatpush1.msra.mxu0 0.0
      %532 = vmatprep.subr.mxu0 0.0
      %533 = vmatpush1.msra.mxu0 0.0
      %534 = vmatprep.subr.mxu0 0.0
      %535 = vmatpush1.msra.mxu0 0.0
      %536 = vmatprep.subr.mxu0 0.0
      %537 = vmatpush1.msra.mxu0 0.0
      %538 = vmatprep.subr.mxu0 0.0
      %539 = vmatpush1.msra.mxu0 0.0
      %540 = vmatprep.mubr.f32.mxu0 0.0
      %541 = vmatmul.mubr.f32.gmra.mrb[0].mxu0 %v474
      %v542 = vpop.f32.mrb[0].mxu0
      %v543 = vadd.f32 %v470, %v542
      %v544 = vpop.f32.mrb[0].mxu0
      %545 = vdwg.mxu0
      %v546 = vmul.f32 %v543, %v543
      %vm547 = vcmask 517120
      %v548 = vsel %vm547, %v546, 0.0
      %549 = vadd.xlane.f32.xlu0 %v548
      %v550 = vpop.xlane.xlu0 %549
      %v551 = vmax.f32 %v550, 1e-24
      %v552 = vrsqrt.pop %v551
      %v553 = vmul.f32 %v543, %v552
      %554 = vst.msk [vmem:[#allocation7] sm:$0x3] %vm547, %v553
    $region41: #{tpu_custom_call.1} parent=1 // pred_fallthru
      _
    // Predicated region
    $region42: #{tpu_custom_call.1} parent=1 // pred_check
      _
    $region43: #{tpu_custom_call.1} parent=1 // pred_check_branch
      %556 = sbr.rel (0) target = $region45
    $region44: #{tpu_custom_call.1} parent=1 // pred_region
      %s558 = ssub.s32 32, 32
      %559 = vsyncadd [#allocation5], %s558
      %s561 = sshll.u32 [#allocation6], 4
      %s562 = int_to_ptr.vmem [resolvable:$true] %s561
      %564 = dma.vmem_to_hbm [thread:$0]  %s562, 32, %s7, [#allocation5]
    $region45: #{tpu_custom_call.1} parent=1 // pred_fallthru
      _
    // Predicated region
    $region46: #{tpu_custom_call.1} parent=1 // pred_check
      _
    $region47: #{tpu_custom_call.1} parent=1 // pred_check_branch
      %566 = sbr.rel (0) target = $region49
    $region48: #{tpu_custom_call.1} parent=1 // pred_region
      %s568 = ssub.s32 32, 32
      %569 = vsyncadd [#allocation8], %s568
      %s571 = sshll.u32 [#allocation7], 4
      %s572 = int_to_ptr.vmem [resolvable:$true] %s571
      %574 = dma.vmem_to_hbm [thread:$0]  %s572, 32, %s8, [#allocation8]
    $region49: #{tpu_custom_call.1} parent=1 // pred_fallthru
      _
    // Predicated region
    $region50: #{tpu_custom_call.1} parent=1 // pred_check
      _
    $region51: #{tpu_custom_call.1} parent=1 // pred_check_branch
      %576 = sbr.rel (0) target = $region53
    $region52: #{tpu_custom_call.1} parent=1 // pred_region
      %577 = dma.done [#allocation5], 32
    $region53: #{tpu_custom_call.1} parent=1 // pred_fallthru
      _
    // Predicated region
    $region54: #{tpu_custom_call.1} parent=1 // pred_check
      _
    $region55: #{tpu_custom_call.1} parent=1 // pred_check_branch
      %579 = sbr.rel (0) target = $region57
    $region56: #{tpu_custom_call.1} parent=1 // pred_region
      %580 = dma.done [#allocation8], 32
    $region57: #{tpu_custom_call.1} parent=1 // pred_fallthru
      _
    %581 = vsyncpa [#allocation4], 1
    %582 = vsyncpa [#allocation5], 1
    %583 = vsyncpa [#allocation8], 1

</llo_original>
